<compile_context>
chip_gen: v5e
topology: v5e:2x2
jax: 0.10.0
libtpu: 0.0.40
codegen_flags: <defaults>
</compile_context>

<pallas_src>
import functools

import jax
import jax.numpy as jnp
from jax.experimental import pallas as pl
from jax.experimental.pallas import tpu as pltpu

HEAD_LANES = 128  # fused actor+critic head padded to one full lane tile


def _round_up(x, m):
    return ((x + m - 1) // m) * m


def rlbase_kernel(state_ref,
                  w1_ref, b1_ref,
                  w2_ref, b2_ref,
                  wh_ref, bh_ref,
                  out_ref, *, num_actions):
    # In-kernel f32 -> bf16 cast of the state (saves a wrapper-side HBM pass).
    x = state_ref[...].astype(jnp.bfloat16)                       # (TB, S)

    # --- common trunk: two Linear+ReLU layers (bf16 MXU, f32 accumulate) ---
    h = jnp.dot(x, w1_ref[...], preferred_element_type=jnp.float32) + b1_ref[...]
    h = jnp.maximum(h.astype(jnp.bfloat16), 0)    # bf16 ReLU (== f32 ReLU then cast)
    h = jnp.dot(h, w2_ref[...], preferred_element_type=jnp.float32) + b2_ref[...]
    h = jnp.maximum(h.astype(jnp.bfloat16), 0)

    # --- fused actor+critic head: one lane-dense (TB, 128) matmul ---
    # lanes [0, A) = actor logits, lane A = critic value, lanes > A = padding.
    head = jnp.dot(h, wh_ref[...], preferred_element_type=jnp.float32) + bh_ref[...]

    lane = jax.lax.broadcasted_iota(jnp.int32, head.shape, 1)
    actor_mask = lane < num_actions

    # Numerically stable softmax restricted to the actor lanes (all f32).
    logits = jnp.where(actor_mask, head, jnp.float32(-1e30))
    m = jnp.max(logits, axis=-1, keepdims=True)
    e = jnp.exp(logits - m)                       # padded lanes underflow to exactly 0
    denom = jnp.sum(e, axis=-1, keepdims=True)
    probs = e / denom                             # EXACT divide: probs sum to 1 in f32

    # One unmasked, lane-dense bf16 store: probs in actor lanes, value in lane A.
    out_ref[...] = jnp.where(lane == num_actions, head, probs).astype(out_ref.dtype)


def prepare_params(params):
    """Call-once packing of module params for the kernel.

    Fuses the actor (H,A) and critic (H,1) heads into one lane-dense (H,128)
    matrix and pre-casts the weights to bf16 (biases stay f32).  Hoisted out
    of the forward so these XLA ops never run per call.
    """
    H = params["w1"].shape[1]
    A = params["wa"].shape[1]
    assert A + 1 <= HEAD_LANES, "action dim must fit in one lane tile"

    w_head = jnp.zeros((H, HEAD_LANES), jnp.float32)
    w_head = w_head.at[:, :A].set(params["wa"]).at[:, A:A + 1].set(params["wc"])
    b_head = jnp.zeros((1, HEAD_LANES), jnp.float32)
    b_head = b_head.at[:, :A].set(params["ba"]).at[:, A:A + 1].set(params["bc"])

    bf = lambda a: a.astype(jnp.bfloat16)
    return dict(
        w1=bf(params["w1"]), b1=params["b1"],
        w2=bf(params["w2"]), b2=params["b2"],
        wh=bf(w_head), bh=b_head,
        num_actions=A,
    )


def rlbase_forward(state, prep, *, tile_b=1024):
    """state: (B, S) float32; prep: prepare_params(...) output.

    Returns (actor_probs (B, A) f32, critic_value (B, 1) f32).
    """
    B, S = state.shape
    H = prep["w1"].shape[1]
    A = prep["num_actions"]

    # Batch tiling: large sublane-aligned tiles; when the batch allows it,
    # force >= 2 grid steps so the "parallel" axis splits across v7x's 2 TCs.
    Bp8 = _round_up(B, 8)
    tb = min(_round_up(tile_b, 8), Bp8)
    if pl.cdiv(Bp8, tb) < 2 and Bp8 >= 16:
        tb = _round_up(pl.cdiv(Bp8, 2), 8)
    Bp = _round_up(B, tb)
    state_p = state if Bp == B else jnp.pad(state, ((0, Bp - B), (0, 0)))
    grid = (Bp // tb,)

    const = lambda i: (0, 0)  # weights/biases resident in VMEM across the grid
    kernel = functools.partial(rlbase_kernel, num_actions=A)

    out = pl.pallas_call(
        kernel,
        out_shape=jax.ShapeDtypeStruct((Bp, HEAD_LANES), jnp.bfloat16),
        grid_spec=pltpu.PrefetchScalarGridSpec(
            num_scalar_prefetch=0,
            grid=grid,
            in_specs=[
                pl.BlockSpec((tb, S), lambda i: (i, 0)),      # state tile (pipelined, f32)
                pl.BlockSpec((S, H), const),                  # w1 (bf16)
                pl.BlockSpec((1, H), const),                  # b1 (f32)
                pl.BlockSpec((H, H), const),                  # w2 (bf16)
                pl.BlockSpec((1, H), const),                  # b2 (f32)
                pl.BlockSpec((H, HEAD_LANES), const),         # fused head weight (bf16)
                pl.BlockSpec((1, HEAD_LANES), const),         # fused head bias (f32)
            ],
            out_specs=pl.BlockSpec((tb, HEAD_LANES), lambda i: (i, 0)),
        ),
        compiler_params=pltpu.CompilerParams(
            dimension_semantics=("parallel",),    # megacore split on v7x
            vmem_limit_bytes=32 * 1024 * 1024,
        ),
    )(state_p, prep["w1"], prep["b1"], prep["w2"], prep["b2"],
      prep["wh"], prep["bh"])

    # Note: for maximum throughput consume the bf16 slab `out` directly
    # downstream; the slices/upcasts below only exist to match the module's
    # (actor, critic) return signature.
    actor = out[:B, :A].astype(jnp.float32)
    critic = out[:B, A:A + 1].astype(jnp.float32)
    return actor, critic


def init_params(key, state_dim, hidden_dim, action_dim):
    """Deterministic synthetic parameters. Weights stored as (in, out)."""
    ks = jax.random.split(key, 8)

    def lin(kw, kb, fan_in, fan_out):
        scale = 1.0 / jnp.sqrt(fan_in)
        w = jax.random.uniform(kw, (fan_in, fan_out), jnp.float32, -scale, scale)
        b = jax.random.uniform(kb, (1, fan_out), jnp.float32, -scale, scale)
        return w, b

    w1, b1 = lin(ks[0], ks[1], state_dim, hidden_dim)
    w2, b2 = lin(ks[2], ks[3], hidden_dim, hidden_dim)
    wa, ba = lin(ks[4], ks[5], hidden_dim, action_dim)
    wc, bc = lin(ks[6], ks[7], hidden_dim, 1)
    return dict(w1=w1, b1=b1, w2=w2, b2=b2, wa=wa, ba=ba, wc=wc, bc=bc)


def rlbase_reference(state, p):
    """Pure-JAX reference mirroring the kernel's bf16-in / f32-accumulate math."""
    bf = lambda a: a.astype(jnp.bfloat16)
    h = jnp.dot(bf(state), bf(p["w1"]), preferred_element_type=jnp.float32) + p["b1"]
    h = jnp.maximum(h.astype(jnp.bfloat16), 0)
    h = jnp.dot(h, bf(p["w2"]), preferred_element_type=jnp.float32) + p["b2"]
    h = jnp.maximum(h.astype(jnp.bfloat16), 0)
    logits = jnp.dot(h, bf(p["wa"]), preferred_element_type=jnp.float32) + p["ba"]
    actor = jax.nn.softmax(logits, axis=-1)
    critic = jnp.dot(h, bf(p["wc"]), preferred_element_type=jnp.float32) + p["bc"]
    return actor, critic


if __name__ == "__main__":
    B, S, H, A = 8, 16, 128, 8   # batch, state_dim, hidden, num_actions

    key = jax.random.PRNGKey(0)
    k_state, k_params, k_state2 = jax.random.split(key, 3)
    state = jax.random.normal(k_state, (B, S), dtype=jnp.float32)
    params = init_params(k_params, S, H, A)
    prep = prepare_params(params)          # one-time fused/bf16 param packing

    # Small case (grid of one tile).
    actor, critic = jax.block_until_ready(rlbase_forward(state, prep))
    ref_actor, ref_critic = rlbase_reference(state, params)
    assert actor.shape == (B, A) and critic.shape == (B, 1)
    # bf16 output slab -> ~2^-9 relative rounding on probs / values.
    assert jnp.allclose(actor, ref_actor, atol=5e-3, rtol=5e-3)
    assert jnp.allclose(critic, ref_critic, atol=5e-3, rtol=5e-3)
    assert jnp.allclose(jnp.sum(actor, axis=-1), 1.0, atol=5e-3)

    # Larger, non-tile-aligned batch: exercises padding and the >=2 grid steps
    # (megacore) path.
    B2 = 300
    state2 = jax.random.normal(k_state2, (B2, S), dtype=jnp.float32)
    actor2, critic2 = jax.block_until_ready(rlbase_forward(state2, prep))
    ref_actor2, ref_critic2 = rlbase_reference(state2, params)
    assert actor2.shape == (B2, A) and critic2.shape == (B2, 1)
    assert jnp.allclose(actor2, ref_actor2, atol=5e-3, rtol=5e-3)
    assert jnp.allclose(critic2, ref_critic2, atol=5e-3, rtol=5e-3)
    assert jnp.allclose(jnp.sum(actor2, axis=-1), 1.0, atol=5e-3)

    print("KERNEL_OK")
</pallas_src>

<mosaic_0001>
module attributes {stable_mosaic.version = 11 : i64} {
  func.func @rlbase_kernel(%arg0: i32, %arg1: memref<8x16xf32, #tpu.memory_space<vmem>>, %arg2: memref<16x128xbf16, #tpu.memory_space<vmem>>, %arg3: memref<1x128xf32, #tpu.memory_space<vmem>>, %arg4: memref<128x128xbf16, #tpu.memory_space<vmem>>, %arg5: memref<1x128xf32, #tpu.memory_space<vmem>>, %arg6: memref<128x128xbf16, #tpu.memory_space<vmem>>, %arg7: memref<1x128xf32, #tpu.memory_space<vmem>>, %arg8: memref<8x128xbf16, #tpu.memory_space<vmem>>) attributes {dimension_semantics = [#tpu.dimension_semantics<parallel>], iteration_bounds = array<i64: 1>, scalar_prefetch = 0 : i64, scratch_operands = 0 : i64, tpu.core_type = #tpu.core_type<tc>, window_params = [{transform_indices = @transform_0, window_bounds = array<i64: 8, 16>}, {pipeline_mode = #tpu.pipeline_mode<synchronous>, transform_indices = @transform_1, window_bounds = array<i64: 16, 128>}, {pipeline_mode = #tpu.pipeline_mode<synchronous>, transform_indices = @transform_2, window_bounds = array<i64: 1, 128>}, {pipeline_mode = #tpu.pipeline_mode<synchronous>, transform_indices = @transform_3, window_bounds = array<i64: 128, 128>}, {pipeline_mode = #tpu.pipeline_mode<synchronous>, transform_indices = @transform_4, window_bounds = array<i64: 1, 128>}, {pipeline_mode = #tpu.pipeline_mode<synchronous>, transform_indices = @transform_5, window_bounds = array<i64: 128, 128>}, {pipeline_mode = #tpu.pipeline_mode<synchronous>, transform_indices = @transform_6, window_bounds = array<i64: 1, 128>}, {transform_indices = @transform_7, window_bounds = array<i64: 8, 128>}]} {
    %c0 = arith.constant 0 : index
    %c0_0 = arith.constant 0 : index
    %0 = vector.load %arg1[%c0, %c0_0] : memref<8x16xf32, #tpu.memory_space<vmem>>, vector<8x16xf32>
    %1 = arith.truncf %0 : vector<8x16xf32> to vector<8x16xbf16>
    %c0_1 = arith.constant 0 : index
    %c0_2 = arith.constant 0 : index
    %2 = vector.load %arg2[%c0_1, %c0_2] : memref<16x128xbf16, #tpu.memory_space<vmem>>, vector<16x128xbf16>
    %cst = arith.constant dense<0.000000e+00> : vector<8x128xf32>
    %3 = tpu.matmul %1, %2, %cst {dimension_numbers = #tpu.dot_dimension_numbers<[1], [0], [0], [1], [0, 0, 1, 1], [], []>} : vector<8x16xbf16>, vector<16x128xbf16>, vector<8x128xf32> -> vector<8x128xf32>
    %c0_3 = arith.constant 0 : index
    %c0_4 = arith.constant 0 : index
    %4 = vector.load %arg3[%c0_3, %c0_4] : memref<1x128xf32, #tpu.memory_space<vmem>>, vector<1x128xf32>
    %5 = vector.broadcast %4 : vector<1x128xf32> to vector<8x128xf32>
    %6 = arith.addf %3, %5 : vector<8x128xf32>
    %7 = arith.truncf %6 : vector<8x128xf32> to vector<8x128xbf16>
    %cst_5 = arith.constant 0.000000e+00 : bf16
    %8 = vector.broadcast %cst_5 : bf16 to vector<8x128xbf16>
    %9 = arith.maximumf %7, %8 : vector<8x128xbf16>
    %c0_6 = arith.constant 0 : index
    %c0_7 = arith.constant 0 : index
    %10 = vector.load %arg4[%c0_6, %c0_7] : memref<128x128xbf16, #tpu.memory_space<vmem>>, vector<128x128xbf16>
    %cst_8 = arith.constant dense<0.000000e+00> : vector<8x128xf32>
    %11 = tpu.matmul %9, %10, %cst_8 {dimension_numbers = #tpu.dot_dimension_numbers<[1], [0], [0], [1], [0, 0, 1, 1], [], []>} : vector<8x128xbf16>, vector<128x128xbf16>, vector<8x128xf32> -> vector<8x128xf32>
    %c0_9 = arith.constant 0 : index
    %c0_10 = arith.constant 0 : index
    %12 = vector.load %arg5[%c0_9, %c0_10] : memref<1x128xf32, #tpu.memory_space<vmem>>, vector<1x128xf32>
    %13 = vector.broadcast %12 : vector<1x128xf32> to vector<8x128xf32>
    %14 = arith.addf %11, %13 : vector<8x128xf32>
    %15 = arith.truncf %14 : vector<8x128xf32> to vector<8x128xbf16>
    %cst_11 = arith.constant 0.000000e+00 : bf16
    %16 = vector.broadcast %cst_11 : bf16 to vector<8x128xbf16>
    %17 = arith.maximumf %15, %16 : vector<8x128xbf16>
    %c0_12 = arith.constant 0 : index
    %c0_13 = arith.constant 0 : index
    %18 = vector.load %arg6[%c0_12, %c0_13] : memref<128x128xbf16, #tpu.memory_space<vmem>>, vector<128x128xbf16>
    %cst_14 = arith.constant dense<0.000000e+00> : vector<8x128xf32>
    %19 = tpu.matmul %17, %18, %cst_14 {dimension_numbers = #tpu.dot_dimension_numbers<[1], [0], [0], [1], [0, 0, 1, 1], [], []>} : vector<8x128xbf16>, vector<128x128xbf16>, vector<8x128xf32> -> vector<8x128xf32>
    %c0_15 = arith.constant 0 : index
    %c0_16 = arith.constant 0 : index
    %20 = vector.load %arg7[%c0_15, %c0_16] : memref<1x128xf32, #tpu.memory_space<vmem>>, vector<1x128xf32>
    %21 = vector.broadcast %20 : vector<1x128xf32> to vector<8x128xf32>
    %22 = arith.addf %19, %21 : vector<8x128xf32>
    %23 = tpu.iota {dimensions = array<i32: 1>} : vector<8x128xi32>
    %c8_i32 = arith.constant 8 : i32
    %24 = vector.broadcast %c8_i32 : i32 to vector<8x128xi32>
    %25 = arith.cmpi slt, %23, %24 : vector<8x128xi32>
    %cst_17 = arith.constant -1.000000e+30 : f32
    %26 = vector.broadcast %cst_17 : f32 to vector<8x128xf32>
    %27 = arith.select %25, %22, %26 : vector<8x128xi1>, vector<8x128xf32>
    %cst_18 = arith.constant dense<0xFF800000> : vector<8xf32>
    %28 = vector.multi_reduction <maximumf>, %27, %cst_18 [1] : vector<8x128xf32> to vector<8xf32>
    %29 = vector.shape_cast %28 : vector<8xf32> to vector<8x1xf32>
    %30 = vector.broadcast %29 : vector<8x1xf32> to vector<8x128xf32>
    %31 = arith.subf %27, %30 : vector<8x128xf32>
    %32 = math.exp %31 : vector<8x128xf32>
    %cst_19 = arith.constant dense<0.000000e+00> : vector<8xf32>
    %33 = vector.multi_reduction <add>, %32, %cst_19 [1] : vector<8x128xf32> to vector<8xf32>
    %34 = vector.shape_cast %33 : vector<8xf32> to vector<8x1xf32>
    %35 = vector.broadcast %34 : vector<8x1xf32> to vector<8x128xf32>
    %36 = arith.divf %32, %35 : vector<8x128xf32>
    %c8_i32_20 = arith.constant 8 : i32
    %37 = vector.broadcast %c8_i32_20 : i32 to vector<8x128xi32>
    %38 = arith.cmpi eq, %23, %37 : vector<8x128xi32>
    %39 = arith.select %38, %22, %36 : vector<8x128xi1>, vector<8x128xf32>
    %40 = arith.truncf %39 : vector<8x128xf32> to vector<8x128xbf16>
    %c0_21 = arith.constant 0 : index
    %c0_22 = arith.constant 0 : index
    %41 = vector.load %arg8[%c0_21, %c0_22] : memref<8x128xbf16, #tpu.memory_space<vmem>>, vector<8x128xbf16>
    tpu.vector_store %arg8[%c0_21, %c0_22], %40 {strides = array<i32>} : memref<8x128xbf16, #tpu.memory_space<vmem>>, vector<8x128xbf16>,
    return
  }
  func.func @transform_0(%arg0: i32) -> (i32, i32) {
    %c0_i32 = arith.constant 0 : i32
    %c0_i32_0 = arith.constant 0 : i32
    return %arg0, %c0_i32 : i32, i32
  }
  func.func @transform_1(%arg0: i32) -> (i32, i32) {
    %c0_i32 = arith.constant 0 : i32
    %c0_i32_0 = arith.constant 0 : i32
    %c0_i32_1 = arith.constant 0 : i32
    return %c0_i32, %c0_i32_0 : i32, i32
  }
  func.func @transform_2(%arg0: i32) -> (i32, i32) {
    %c0_i32 = arith.constant 0 : i32
    %c0_i32_0 = arith.constant 0 : i32
    %c0_i32_1 = arith.constant 0 : i32
    return %c0_i32, %c0_i32_0 : i32, i32
  }
  func.func @transform_3(%arg0: i32) -> (i32, i32) {
    %c0_i32 = arith.constant 0 : i32
    %c0_i32_0 = arith.constant 0 : i32
    %c0_i32_1 = arith.constant 0 : i32
    return %c0_i32, %c0_i32_0 : i32, i32
  }
  func.func @transform_4(%arg0: i32) -> (i32, i32) {
    %c0_i32 = arith.constant 0 : i32
    %c0_i32_0 = arith.constant 0 : i32
    %c0_i32_1 = arith.constant 0 : i32
    return %c0_i32, %c0_i32_0 : i32, i32
  }
  func.func @transform_5(%arg0: i32) -> (i32, i32) {
    %c0_i32 = arith.constant 0 : i32
    %c0_i32_0 = arith.constant 0 : i32
    %c0_i32_1 = arith.constant 0 : i32
    return %c0_i32, %c0_i32_0 : i32, i32
  }
  func.func @transform_6(%arg0: i32) -> (i32, i32) {
    %c0_i32 = arith.constant 0 : i32
    %c0_i32_0 = arith.constant 0 : i32
    %c0_i32_1 = arith.constant 0 : i32
    return %c0_i32, %c0_i32_0 : i32, i32
  }
  func.func @transform_7(%arg0: i32) -> (i32, i32) {
    %c0_i32 = arith.constant 0 : i32
    %c0_i32_0 = arith.constant 0 : i32
    return %arg0, %c0_i32 : i32, i32
  }
}

</mosaic_0001>

<llo_original>
// kernel: tpu_custom_call.1
$region0: #{tpu_custom_call.1}
  #allocation0 [shape = 'u32[]', space=smem, size = 0x4, offset = 0x4, fixed_abs, tag = 'smem constant byte address 0x4 - core index']
  #allocation1 [shape = 'u32[72,128]{1,0:T(1,128)}', space=vmem, size = 0x9000, scoped, tag = 'internal scratch']
  %s0 = inlined_call_operand.hbm [shape: f32[8,16], index: 0, kind: input, shape index: {}]
  %s1 = inlined_call_operand.hbm [shape: bf16[16,128], index: 1, kind: input, shape index: {}]
  %s2 = inlined_call_operand.vmem [shape: f32[1,128], index: 2, kind: input, shape index: {}]
  %s3 = inlined_call_operand.hbm [shape: bf16[128,128], index: 3, kind: input, shape index: {}]
  %s4 = inlined_call_operand.vmem [shape: f32[1,128], index: 4, kind: input, shape index: {}]
  %s5 = inlined_call_operand.hbm [shape: bf16[128,128], index: 5, kind: input, shape index: {}]
  %s6 = inlined_call_operand.vmem [shape: f32[1,128], index: 6, kind: input, shape index: {}]
  %s7 = inlined_call_operand.hbm [shape: bf16[8,128], index: 7, kind: output, shape index: {}]
  %s8 = sld [smem:[#allocation0]]
  $region54: #{tpu_custom_call.1} parent=0
    _
  %s10 = ssub.s32 1, %s8
  %s11 = scalar_select 0, %s10, %s8
  $region1: #{tpu_custom_call.1} parent=0
    #allocation2 [shape = 'u8[4096]{0}', space=vmem, size = 0x1000, scoped, tag = 'input window, operand 0, single buffered']
    #allocation3 [shape = 's32[1]{0}', space=sflag, size = 0x4, scoped, tag = 'scoped memory for tpu_custom_call.1']
    #allocation4 [shape = 's32[1]{0}', space=sflag, size = 0x4, scoped, tag = 'scoped memory for tpu_custom_call.1']
    #allocation5 [shape = 'u8[4096]{0}', space=vmem, size = 0x1000, scoped, tag = 'input window, operand 1, single buffered']
    #allocation6 [shape = 's32[1]{0}', space=sflag, size = 0x4, scoped, tag = 'scoped memory for tpu_custom_call.1']
    #allocation7 [shape = 'u8[32768]{0}', space=vmem, size = 0x8000, scoped, tag = 'input window, operand 3, single buffered']
    #allocation8 [shape = 'u8[32768]{0}', space=vmem, size = 0x8000, scoped, tag = 'input window, operand 5, single buffered']
    #allocation9 [shape = 's32[1]{0}', space=sflag, size = 0x4, scoped, tag = 'scoped memory for tpu_custom_call.1']
    #allocation10 [shape = 'u8[2048]{0}', space=vmem, size = 0x800, scoped, tag = 'output window, operand 0, single buffered']
    %12 = vsyncpa [#allocation3], 0
    %13 = vsyncpa [#allocation6], 0
    %14 = vsyncpa [#allocation9], 0
    %15 = vsyncpa [#allocation4], 0
    // Predicated region
    $region2: #{tpu_custom_call.1} parent=1 // pred_check
      _
    $region3: #{tpu_custom_call.1} parent=1 // pred_check_branch
      %17 = sbr.rel (0) target = $region5
    $region4: #{tpu_custom_call.1} parent=1 // pred_region
      %19 = vsyncadd [#allocation3], 0
      %s21 = sshll.u32 %s0, 4
      %s22 = int_to_ptr.hbm [resolvable:$true] %s21
      %s23 = sshll.u32 [#allocation2], 4
      %s24 = int_to_ptr.vmem [resolvable:$true] %s23
      %26 = dma.hbm_to_vmem [thread:$0]  %s22, 128, %s24, [#allocation3]
    $region5: #{tpu_custom_call.1} parent=1 // pred_fallthru
      _
    // Predicated region
    $region6: #{tpu_custom_call.1} parent=1 // pred_check
      _
    $region7: #{tpu_custom_call.1} parent=1 // pred_check_branch
      %28 = sbr.rel (0) target = $region9
    $region8: #{tpu_custom_call.1} parent=1 // pred_region
      %30 = vsyncadd [#allocation6], 0
      %s31 = sshll.u32 %s1, 4
      %s32 = int_to_ptr.hbm [resolvable:$true] %s31
      %s33 = sshll.u32 [#allocation5], 4
      %s34 = int_to_ptr.vmem [resolvable:$true] %s33
      %39 = dma.hbm_to_vmem [thread:$0]  %s32, 128, %s34, [#allocation6], 64, 64, 4
    $region9: #{tpu_custom_call.1} parent=1 // pred_fallthru
      _
    // Predicated region
    $region10: #{tpu_custom_call.1} parent=1 // pred_check
      _
    $region11: #{tpu_custom_call.1} parent=1 // pred_check_branch
      %41 = sbr.rel (0) target = $region13
    $region12: #{tpu_custom_call.1} parent=1 // pred_region
      _
    $region13: #{tpu_custom_call.1} parent=1 // pred_fallthru
      _
    // Predicated region
    $region14: #{tpu_custom_call.1} parent=1 // pred_check
      _
    $region15: #{tpu_custom_call.1} parent=1 // pred_check_branch
      %43 = sbr.rel (0) target = $region17
    $region16: #{tpu_custom_call.1} parent=1 // pred_region
      %45 = vsyncadd [#allocation6], 0
      %s46 = sshll.u32 %s3, 4
      %s47 = int_to_ptr.hbm [resolvable:$true] %s46
      %s48 = sshll.u32 [#allocation7], 4
      %s49 = int_to_ptr.vmem [resolvable:$true] %s48
      %54 = dma.hbm_to_vmem [thread:$0]  %s47, 1024, %s49, [#allocation6], 64, 64, 4
    $region17: #{tpu_custom_call.1} parent=1 // pred_fallthru
      _
    // Predicated region
    $region18: #{tpu_custom_call.1} parent=1 // pred_check
      _
    $region19: #{tpu_custom_call.1} parent=1 // pred_check_branch
      %56 = sbr.rel (0) target = $region21
    $region20: #{tpu_custom_call.1} parent=1 // pred_region
      _
    $region21: #{tpu_custom_call.1} parent=1 // pred_fallthru
      _
    // Predicated region
    $region22: #{tpu_custom_call.1} parent=1 // pred_check
      _
    $region23: #{tpu_custom_call.1} parent=1 // pred_check_branch
      %58 = sbr.rel (0) target = $region25
    $region24: #{tpu_custom_call.1} parent=1 // pred_region
      %60 = vsyncadd [#allocation9], 0
      %s61 = sshll.u32 %s5, 4
      %s62 = int_to_ptr.hbm [resolvable:$true] %s61
      %s63 = sshll.u32 [#allocation8], 4
      %s64 = int_to_ptr.vmem [resolvable:$true] %s63
      %69 = dma.hbm_to_vmem [thread:$0]  %s62, 1024, %s64, [#allocation9], 64, 64, 4
    $region25: #{tpu_custom_call.1} parent=1 // pred_fallthru
      _
    // Predicated region
    $region26: #{tpu_custom_call.1} parent=1 // pred_check
      _
    $region27: #{tpu_custom_call.1} parent=1 // pred_check_branch
      %71 = sbr.rel (0) target = $region29
    $region28: #{tpu_custom_call.1} parent=1 // pred_region
      _
    $region29: #{tpu_custom_call.1} parent=1 // pred_fallthru
      _
    // Predicated region
    $region30: #{tpu_custom_call.1} parent=1 // pred_check
      _
    $region31: #{tpu_custom_call.1} parent=1 // pred_check_branch
      %73 = sbr.rel (0) target = $region33
    $region32: #{tpu_custom_call.1} parent=1 // pred_region
      %75 = dma.done [#allocation3], 128
    $region33: #{tpu_custom_call.1} parent=1 // pred_fallthru
      _
    // Predicated region
    $region34: #{tpu_custom_call.1} parent=1 // pred_check
      _
    $region35: #{tpu_custom_call.1} parent=1 // pred_check_branch
      %77 = sbr.rel (0) target = $region37
    $region36: #{tpu_custom_call.1} parent=1 // pred_region
      %79 = dma.done [#allocation6], 128
    $region37: #{tpu_custom_call.1} parent=1 // pred_fallthru
      _
    // Predicated region
    $region38: #{tpu_custom_call.1} parent=1 // pred_check
      _
    $region39: #{tpu_custom_call.1} parent=1 // pred_check_branch
      %81 = sbr.rel (0) target = $region41
    $region40: #{tpu_custom_call.1} parent=1 // pred_region
      %83 = dma.done [#allocation6], 1024
    $region41: #{tpu_custom_call.1} parent=1 // pred_fallthru
      _
    // Predicated region
    $region42: #{tpu_custom_call.1} parent=1 // pred_check
      _
    $region43: #{tpu_custom_call.1} parent=1 // pred_check_branch
      %85 = sbr.rel (0) target = $region45
    $region44: #{tpu_custom_call.1} parent=1 // pred_region
      %87 = dma.done [#allocation9], 1024
    $region45: #{tpu_custom_call.1} parent=1 // pred_fallthru
      _
    %v89 = vld [vmem:[#allocation2] sm:$0xff]
    %v90 = vpack.c.bf16 %v89, %v89
    %v91 = vld [vmem:[#allocation5] sm:$0xf]
    %v92 = vld [vmem:[#allocation5 + $0x4] sm:$0xf]
    %v93 = vld [vmem:[%s2] sm:$0x1]
    %v95 = vperm.slane %v93, 0
    %v99 = vunpack.c.l.b16 %v91
    %v100 = vunpack.c.l.b16 %v92
    %v101 = vpack.c.b16 %v100, %v99
    %vm103 = vcmask 130048
    %v105 = vsel %vm103, %v90, 0
    %107 = vmatpush.bf16.msra.mxu0 0
    %108 = vmatpush.bf16.msra.mxu0 0
    %109 = vmatpush.bf16.msra.mxu0 0
    %110 = vmatpush.bf16.msra.mxu0 0
    %111 = vmatpush.bf16.msra.mxu0 0
    %112 = vmatpush.bf16.msra.mxu0 0
    %113 = vmatpush.bf16.msra.mxu0 0
    %114 = vmatpush.bf16.msra.mxu0 %v101
    %115 = vmatmul.bf16.gmra.mxu0 %v105
    %v116 = vpop.f32.mrf.mxu0
    %v117 = vadd.f32 %v95, %v116
    %v118 = vpop.f32.mrf.mxu0
    %119 = vdwg.mxu0
    %v120 = vpack.c.bf16 %v117, %v117
    %v121 = vunpack.c.l.bf16 %v120
    %v122 = vmax.f32 %v121, 0.0
    %v123 = vpack.c.bf16 %v122, %v122
    %v124 = vld [vmem:[#allocation7] sm:$0xf]
    %v125 = vld [vmem:[#allocation7 + $0x4] sm:$0xf]
    %v126 = vld [vmem:[#allocation7 + $0x8] sm:$0xf]
    %v127 = vld [vmem:[#allocation7 + $0xc] sm:$0xf]
    %v128 = vld [vmem:[#allocation7 + $0x10] sm:$0xf]
    %v129 = vld [vmem:[#allocation7 + $0x14] sm:$0xf]
    %v130 = vld [vmem:[#allocation7 + $0x18] sm:$0xf]
    %v131 = vld [vmem:[#allocation7 + $0x1c] sm:$0xf]
    %v132 = vld [vmem:[#allocation7 + $0x20] sm:$0xf]
    %v133 = vld [vmem:[#allocation7 + $0x24] sm:$0xf]
    %v134 = vld [vmem:[#allocation7 + $0x28] sm:$0xf]
    %v135 = vld [vmem:[#allocation7 + $0x2c] sm:$0xf]
    %v136 = vld [vmem:[#allocation7 + $0x30] sm:$0xf]
    %v137 = vld [vmem:[#allocation7 + $0x34] sm:$0xf]
    %v138 = vld [vmem:[#allocation7 + $0x38] sm:$0xf]
    %v139 = vld [vmem:[#allocation7 + $0x3c] sm:$0xf]
    %v140 = vld [vmem:[%s4] sm:$0x1]
    %v142 = vperm.slane %v140, 0
    %v160 = vunpack.c.l.b16 %v124
    %v161 = vunpack.c.l.b16 %v125
    %v162 = vunpack.c.l.b16 %v126
    %v163 = vunpack.c.l.b16 %v127
    %v164 = vunpack.c.l.b16 %v128
    %v165 = vunpack.c.l.b16 %v129
    %v166 = vunpack.c.l.b16 %v130
    %v167 = vunpack.c.l.b16 %v131
    %v168 = vunpack.c.l.b16 %v132
    %v169 = vunpack.c.l.b16 %v133
    %v170 = vunpack.c.l.b16 %v134
    %v171 = vunpack.c.l.b16 %v135
    %v172 = vunpack.c.l.b16 %v136
    %v173 = vunpack.c.l.b16 %v137
    %v174 = vunpack.c.l.b16 %v138
    %v175 = vunpack.c.l.b16 %v139
    %v176 = vpack.c.b16 %v161, %v160
    %v177 = vpack.c.b16 %v163, %v162
    %v178 = vpack.c.b16 %v165, %v164
    %v179 = vpack.c.b16 %v167, %v166
    %v180 = vpack.c.b16 %v169, %v168
    %v181 = vpack.c.b16 %v171, %v170
    %v182 = vpack.c.b16 %v173, %v172
    %v183 = vpack.c.b16 %v175, %v174
    %192 = vmatpush.bf16.msra.mxu0 %v183
    %193 = vmatpush.bf16.msra.mxu0 %v182
    %194 = vmatpush.bf16.msra.mxu0 %v181
    %195 = vmatpush.bf16.msra.mxu0 %v180
    %196 = vmatpush.bf16.msra.mxu0 %v179
    %197 = vmatpush.bf16.msra.mxu0 %v178
    %198 = vmatpush.bf16.msra.mxu0 %v177
    %199 = vmatpush.bf16.msra.mxu0 %v176
    %200 = vmatmul.bf16.gmra.mxu0 %v123
    %v201 = vpop.f32.mrf.mxu0
    %v202 = vadd.f32 %v142, %v201
    %v203 = vpop.f32.mrf.mxu0
    %204 = vdwg.mxu0
    %v205 = vpack.c.bf16 %v202, %v202
    %v206 = vunpack.c.l.bf16 %v205
    %v207 = vmax.f32 %v206, 0.0
    %v208 = vpack.c.bf16 %v207, %v207
    %v209 = vld [vmem:[#allocation8] sm:$0xf]
    %v210 = vld [vmem:[#allocation8 + $0x4] sm:$0xf]
    %v211 = vld [vmem:[#allocation8 + $0x8] sm:$0xf]
    %v212 = vld [vmem:[#allocation8 + $0xc] sm:$0xf]
    %v213 = vld [vmem:[#allocation8 + $0x10] sm:$0xf]
    %v214 = vld [vmem:[#allocation8 + $0x14] sm:$0xf]
    %v215 = vld [vmem:[#allocation8 + $0x18] sm:$0xf]
    %v216 = vld [vmem:[#allocation8 + $0x1c] sm:$0xf]
    %v217 = vld [vmem:[#allocation8 + $0x20] sm:$0xf]
    %v218 = vld [vmem:[#allocation8 + $0x24] sm:$0xf]
    %v219 = vld [vmem:[#allocation8 + $0x28] sm:$0xf]
    %v220 = vld [vmem:[#allocation8 + $0x2c] sm:$0xf]
    %v221 = vld [vmem:[#allocation8 + $0x30] sm:$0xf]
    %v222 = vld [vmem:[#allocation8 + $0x34] sm:$0xf]
    %v223 = vld [vmem:[#allocation8 + $0x38] sm:$0xf]
    %v224 = vld [vmem:[#allocation8 + $0x3c] sm:$0xf]
    %v225 = vld [vmem:[%s6] sm:$0x1]
    %v227 = vperm.slane %v225, 0
    %v245 = vunpack.c.l.b16 %v209
    %v246 = vunpack.c.l.b16 %v210
    %v247 = vunpack.c.l.b16 %v211
    %v248 = vunpack.c.l.b16 %v212
    %v249 = vunpack.c.l.b16 %v213
    %v250 = vunpack.c.l.b16 %v214
    %v251 = vunpack.c.l.b16 %v215
    %v252 = vunpack.c.l.b16 %v216
    %v253 = vunpack.c.l.b16 %v217
    %v254 = vunpack.c.l.b16 %v218
    %v255 = vunpack.c.l.b16 %v219
    %v256 = vunpack.c.l.b16 %v220
    %v257 = vunpack.c.l.b16 %v221
    %v258 = vunpack.c.l.b16 %v222
    %v259 = vunpack.c.l.b16 %v223
    %v260 = vunpack.c.l.b16 %v224
    %v261 = vpack.c.b16 %v246, %v245
    %v262 = vpack.c.b16 %v248, %v247
    %v263 = vpack.c.b16 %v250, %v249
    %v264 = vpack.c.b16 %v252, %v251
    %v265 = vpack.c.b16 %v254, %v253
    %v266 = vpack.c.b16 %v256, %v255
    %v267 = vpack.c.b16 %v258, %v257
    %v268 = vpack.c.b16 %v260, %v259
    %277 = vmatpush.bf16.msra.mxu0 %v268
    %278 = vmatpush.bf16.msra.mxu0 %v267
    %279 = vmatpush.bf16.msra.mxu0 %v266
    %280 = vmatpush.bf16.msra.mxu0 %v265
    %281 = vmatpush.bf16.msra.mxu0 %v264
    %282 = vmatpush.bf16.msra.mxu0 %v263
    %283 = vmatpush.bf16.msra.mxu0 %v262
    %284 = vmatpush.bf16.msra.mxu0 %v261
    %285 = vmatmul.bf16.gmra.mxu0 %v208
    %v286 = vpop.f32.mrf.mxu0
    %v287 = vadd.f32 %v227, %v286
    %v288 = vpop.f32.mrf.mxu0
    %289 = vdwg.mxu0
    %v290 = vlaneseq
    %v291 = vand.u32 %v290, 127
    %vm292 = vcmp.lt.s32.totalorder %v291, 8
    %v293 = vsel %vm292, %v287, -1e+30
    %294 = vmax.xlane.f32.xlu0 %v293
    %v295 = vpop.xlane.xlu0 %294
    %v296 = vsub.f32 %v293, %v295
    %v297 = vmul.f32 %v296, 1.442695
    %v298 = vpow.pop %v297
    %299 = vadd.xlane.f32.xlu0 %v298
    %v300 = vpop.xlane.xlu0 %299
    %v301 = vrcp.pop %v300
    %v302 = vmul.f32 %v300, %v301
    %v303 = vsub.f32 1.0, %v302
    %v304 = vmul.f32 %v301, %v303
    %v305 = vadd.f32 %v301, %v304
    %vm306 = vweird.f32 %v300
    %vm307 = vweird.f32 %v301
    %vm308 = vmor %vm306, %vm307
    %v309 = vsel %vm308, %v301, %v305
    %v310 = vand.u32 2147483647, %v300
    %vm311 = vcmp.eq.f32.partialorder %v310, 8.507059e+37
    %v312 = vand.u32 %v300, 2147483648
    %v313 = vor.u32 1.1754944e-38, %v312
    %v314 = vsel %vm311, %v313, %v309
    %v315 = vmul.f32 %v298, %v314
    %vm316 = vcmp.eq.s32.totalorder %v291, 8
    %v317 = vsel %vm316, %v287, %v315
    %v318 = vpack.c.bf16 %v317, %v317
    %319 = vst [vmem:[#allocation10] sm:$0xf] %v318
    // Predicated region
    $region46: #{tpu_custom_call.1} parent=1 // pred_check
      _
    $region47: #{tpu_custom_call.1} parent=1 // pred_check_branch
      %321 = sbr.rel (0) target = $region49
    $region48: #{tpu_custom_call.1} parent=1 // pred_region
      %323 = vsyncadd [#allocation4], 0
      %s325 = sshll.u32 [#allocation10], 4
      %s326 = int_to_ptr.vmem [resolvable:$true] %s325
      %s327 = sshll.u32 %s7, 4
      %s328 = int_to_ptr.hbm [resolvable:$true] %s327
      %330 = dma.vmem_to_hbm [thread:$0]  %s326, 64, %s328, [#allocation4]
    $region49: #{tpu_custom_call.1} parent=1 // pred_fallthru
      _
    // Predicated region
    $region50: #{tpu_custom_call.1} parent=1 // pred_check
      _
    $region51: #{tpu_custom_call.1} parent=1 // pred_check_branch
      %332 = sbr.rel (0) target = $region53
    $region52: #{tpu_custom_call.1} parent=1 // pred_region
      %334 = dma.done [#allocation4], 64
    $region53: #{tpu_custom_call.1} parent=1 // pred_fallthru
      _
    %335 = vsyncpa [#allocation3], 1
    %336 = vsyncpa [#allocation6], 1
    %337 = vsyncpa [#allocation9], 1
    %338 = vsyncpa [#allocation4], 1

</llo_original>
